<compile_context>
chip_gen: v5e
topology: v5e:2x2
jax: 0.10.0
libtpu: 0.0.40
codegen_flags: <defaults>
</compile_context>

<pallas_src>
import jax
import jax.numpy as jnp
from jax.experimental import pallas as pl
from jax.experimental.pallas import tpu as pltpu


def _pick_tile(total, max_tile, quantum):
    """Largest divisor of `total` that is <= max_tile and a multiple of `quantum`.
    Falls back to `total` itself (full-dim blocks always satisfy the (8,128) rule)."""
    if total <= max_tile:
        return total
    t = (max_tile // quantum) * quantum
    while t >= quantum:
        if total % t == 0:
            return t
        t -= quantum
    return total


def bn_prelu(x_nchw, gamma, beta, alpha, eps=1e-3):
    """Training-mode BatchNorm2d(eps) + per-channel PReLU forward.

    x_nchw: (N, C, H, W); gamma/beta/alpha: (C,).
    """
    # TODO(synk): nn.BatchNorm2d's running_mean/running_var EMA buffers are not updated here;
    # they do not affect the training-mode forward output.
    n, c, h, w = x_nchw.shape
    hw = h * w
    x3 = x_nchw.reshape(n, c, hw)  # trailing-dim flatten: free, no transpose / copy

    c_t = _pick_tile(c, max_tile=64, quantum=8)        # channels per sublane tile
    hw_t = _pick_tile(hw, max_tile=4096, quantum=128)  # lane-tile width (mem-bound sweet spot)
    n_ct = c // c_t
    n_hwt = hw // hw_t
    total_steps = n * n_hwt

    f32 = jnp.float32
    g2 = gamma.reshape(c, 1).astype(f32)
    b2 = beta.reshape(c, 1).astype(f32)
    a2 = alpha.reshape(c, 1).astype(f32)

    inv_hw_t = 1.0 / float(hw_t)
    inv_total = 1.0 / float(n * hw)

    # ---------------- pass 1: per-channel stats -> fused scale / shift ----------------
    def stats_kernel(x_ref, g_ref, b_ref, scale_ref, shift_ref, mean_acc, m2_acc):
        ni = pl.program_id(1)
        ti = pl.program_id(2)
        step = ni * n_hwt + ti

        x = x_ref[...].astype(f32)                                   # (c_t, hw_t)
        tile_mean = jnp.sum(x, axis=-1, keepdims=True) * inv_hw_t    # (c_t, 1)
        d = x - tile_mean
        tile_m2 = jnp.sum(d * d, axis=-1, keepdims=True)             # (c_t, 1)

        @pl.when(step == 0)
        def _():
            mean_acc[...] = tile_mean
            m2_acc[...] = tile_m2

        @pl.when(step > 0)
        def _():
            # Chan / parallel-Welford combine of running (mean, M2) with this tile's stats.
            # Counts kept in f32 so huge N*H*W can't overflow int32 scalar math.
            n_a = step.astype(f32) * float(hw_t)
            n_b = float(hw_t)
            frac = n_b / (n_a + n_b)
            delta = tile_mean - mean_acc[...]
            mean_acc[...] = mean_acc[...] + delta * frac
            m2_acc[...] = m2_acc[...] + tile_m2 + (delta * delta) * (n_a * frac)

        @pl.when(step == total_steps - 1)
        def _():
            var = m2_acc[...] * inv_total                 # biased variance (BN forward)
            inv_std = jax.lax.rsqrt(var + eps)
            scale = g_ref[...] * inv_std
            scale_ref[...] = scale
            shift_ref[...] = b_ref[...] - mean_acc[...] * scale

    scale, shift = pl.pallas_call(
        stats_kernel,
        out_shape=(jax.ShapeDtypeStruct((c, 1), f32),
                   jax.ShapeDtypeStruct((c, 1), f32)),
        grid_spec=pltpu.PrefetchScalarGridSpec(
            num_scalar_prefetch=0,
            grid=(n_ct, n, n_hwt),
            in_specs=[
                pl.BlockSpec((None, c_t, hw_t), lambda ci, ni, ti: (ni, ci, ti)),
                pl.BlockSpec((c_t, 1), lambda ci, ni, ti: (ci, 0)),
                pl.BlockSpec((c_t, 1), lambda ci, ni, ti: (ci, 0)),
            ],
            out_specs=(
                pl.BlockSpec((c_t, 1), lambda ci, ni, ti: (ci, 0)),
                pl.BlockSpec((c_t, 1), lambda ci, ni, ti: (ci, 0)),
            ),
            scratch_shapes=[pltpu.VMEM((c_t, 1), f32),
                            pltpu.VMEM((c_t, 1), f32)],
        ),
        compiler_params=pltpu.CompilerParams(
            dimension_semantics=("parallel", "arbitrary", "arbitrary")),
    )(x3, g2, b2)

    # ---------------- pass 2: normalize + PReLU (single FMA + select per element) -----
    def norm_kernel(x_ref, scale_ref, shift_ref, alpha_ref, o_ref):
        x = x_ref[...].astype(f32)
        y = x * scale_ref[...] + shift_ref[...]
        o_ref[...] = jnp.where(y >= 0, y, alpha_ref[...] * y).astype(o_ref.dtype)

    out3 = pl.pallas_call(
        norm_kernel,
        out_shape=jax.ShapeDtypeStruct((n, c, hw), x_nchw.dtype),
        grid_spec=pltpu.PrefetchScalarGridSpec(
            num_scalar_prefetch=0,
            grid=(n_ct, n, n_hwt),
            in_specs=[
                pl.BlockSpec((None, c_t, hw_t), lambda ci, ni, ti: (ni, ci, ti)),
                pl.BlockSpec((c_t, 1), lambda ci, ni, ti: (ci, 0)),
                pl.BlockSpec((c_t, 1), lambda ci, ni, ti: (ci, 0)),
                pl.BlockSpec((c_t, 1), lambda ci, ni, ti: (ci, 0)),
            ],
            out_specs=pl.BlockSpec((None, c_t, hw_t), lambda ci, ni, ti: (ni, ci, ti)),
        ),
        compiler_params=pltpu.CompilerParams(
            dimension_semantics=("parallel", "parallel", "parallel")),
    )(x3, scale, shift, a2)

    return out3.reshape(n, c, h, w)


if __name__ == "__main__":
    key = jax.random.PRNGKey(0)
    kx, kg, kb = jax.random.split(key, 3)

    N, C, H, W = 2, 4, 16, 16
    x = jax.random.normal(kx, (N, C, H, W), dtype=jnp.float32)

    # Deterministic parameters (shapes per nn.BatchNorm2d(C) + nn.PReLU(C)).
    gamma = 1.0 + 0.1 * jax.random.normal(kg, (C,), dtype=jnp.float32)  # bn.weight
    beta = 0.1 * jax.random.normal(kb, (C,), dtype=jnp.float32)         # bn.bias
    alpha = jnp.full((C,), 0.25, dtype=jnp.float32)                     # PReLU weight

    out = bn_prelu(x, gamma, beta, alpha)
    jax.block_until_ready(out)

    # Pure-JAX reference (training-mode BatchNorm2d(eps=1e-3) + PReLU).
    mean = jnp.mean(x, axis=(0, 2, 3), keepdims=True)
    var = jnp.var(x, axis=(0, 2, 3), keepdims=True)
    y = (x - mean) / jnp.sqrt(var + 1e-3)
    y = y * gamma.reshape(1, C, 1, 1) + beta.reshape(1, C, 1, 1)
    ref = jnp.where(y >= 0, y, alpha.reshape(1, C, 1, 1) * y)
    assert jnp.allclose(out, ref, atol=1e-4, rtol=1e-4), float(jnp.max(jnp.abs(out - ref)))

    print("KERNEL_OK")
</pallas_src>

<mosaic_0001>
module attributes {stable_mosaic.version = 11 : i64} {
  func.func @stats_kernel(%arg0: i32, %arg1: i32, %arg2: i32, %arg3: memref<1x4x256xf32, #tpu.memory_space<vmem>>, %arg4: memref<4x1xf32, #tpu.memory_space<vmem>>, %arg5: memref<4x1xf32, #tpu.memory_space<vmem>>, %arg6: memref<4x1xf32, #tpu.memory_space<vmem>>, %arg7: memref<4x1xf32, #tpu.memory_space<vmem>>, %arg8: memref<4x1xf32, #tpu.memory_space<vmem>>, %arg9: memref<4x1xf32, #tpu.memory_space<vmem>>) attributes {dimension_semantics = [#tpu.dimension_semantics<parallel>, #tpu.dimension_semantics<arbitrary>, #tpu.dimension_semantics<arbitrary>], iteration_bounds = array<i64: 1, 2, 1>, scalar_prefetch = 0 : i64, scratch_operands = 2 : i64, tpu.core_type = #tpu.core_type<tc>, window_params = [{transform_indices = @transform_0, window_bounds = array<i64: 1, 4, 256>}, {transform_indices = @transform_1, window_bounds = array<i64: 4, 1>}, {transform_indices = @transform_2, window_bounds = array<i64: 4, 1>}, {transform_indices = @transform_3, window_bounds = array<i64: 4, 1>}, {transform_indices = @transform_4, window_bounds = array<i64: 4, 1>}]} {
    %c1_i32 = arith.constant 1 : i32
    %0 = arith.muli %arg1, %c1_i32 : i32
    %1 = arith.addi %0, %arg2 : i32
    %c0 = arith.constant 0 : index
    %c0_0 = arith.constant 0 : index
    %c0_1 = arith.constant 0 : index
    %2 = vector.load %arg3[%c0, %c0_0, %c0_1] : memref<1x4x256xf32, #tpu.memory_space<vmem>>, vector<1x4x256xf32>
    %3 = vector.shape_cast %2 : vector<1x4x256xf32> to vector<4x256xf32>
    %cst = arith.constant dense<0.000000e+00> : vector<4xf32>
    %4 = vector.multi_reduction <add>, %3, %cst [1] : vector<4x256xf32> to vector<4xf32>
    %5 = vector.shape_cast %4 : vector<4xf32> to vector<4x1xf32>
    %cst_2 = arith.constant 3.906250e-03 : f32
    %6 = vector.broadcast %cst_2 : f32 to vector<4x1xf32>
    %7 = arith.mulf %5, %6 : vector<4x1xf32>
    %8 = vector.broadcast %7 : vector<4x1xf32> to vector<4x256xf32>
    %9 = arith.subf %3, %8 : vector<4x256xf32>
    %10 = arith.mulf %9, %9 : vector<4x256xf32>
    %cst_3 = arith.constant dense<0.000000e+00> : vector<4xf32>
    %11 = vector.multi_reduction <add>, %10, %cst_3 [1] : vector<4x256xf32> to vector<4xf32>
    %12 = vector.shape_cast %11 : vector<4xf32> to vector<4x1xf32>
    %c0_i32 = arith.constant 0 : i32
    %13 = arith.cmpi eq, %1, %c0_i32 : i32
    %14 = arith.extui %13 : i1 to i32
    %c0_i32_4 = arith.constant 0 : i32
    %15 = arith.cmpi ne, %14, %c0_i32_4 : i32
    scf.if %15 {
      %c0_9 = arith.constant 0 : index
      %c0_10 = arith.constant 0 : index
      %22 = vector.load %arg8[%c0_9, %c0_10] : memref<4x1xf32, #tpu.memory_space<vmem>>, vector<4x1xf32>
      tpu.vector_store %arg8[%c0_9, %c0_10], %7 {strides = array<i32>} : memref<4x1xf32, #tpu.memory_space<vmem>>, vector<4x1xf32>,
      %c0_11 = arith.constant 0 : index
      %c0_12 = arith.constant 0 : index
      %23 = vector.load %arg9[%c0_11, %c0_12] : memref<4x1xf32, #tpu.memory_space<vmem>>, vector<4x1xf32>
      tpu.vector_store %arg9[%c0_11, %c0_12], %12 {strides = array<i32>} : memref<4x1xf32, #tpu.memory_space<vmem>>, vector<4x1xf32>,
    } else {
    }
    %c0_i32_5 = arith.constant 0 : i32
    %16 = arith.cmpi sgt, %1, %c0_i32_5 : i32
    %17 = arith.extui %16 : i1 to i32
    %c0_i32_6 = arith.constant 0 : i32
    %18 = arith.cmpi ne, %17, %c0_i32_6 : i32
    scf.if %18 {
      %22 = arith.sitofp %1 : i32 to f32
      %cst_9 = arith.constant 2.560000e+02 : f32
      %23 = arith.mulf %22, %cst_9 : f32
      %cst_10 = arith.constant 2.560000e+02 : f32
      %24 = arith.addf %23, %cst_10 : f32
      %cst_11 = arith.constant 2.560000e+02 : f32
      %25 = arith.divf %cst_11, %24 : f32
      %c0_12 = arith.constant 0 : index
      %c0_13 = arith.constant 0 : index
      %26 = vector.load %arg8[%c0_12, %c0_13] : memref<4x1xf32, #tpu.memory_space<vmem>>, vector<4x1xf32>
      %27 = arith.subf %7, %26 : vector<4x1xf32>
      %c0_14 = arith.constant 0 : index
      %c0_15 = arith.constant 0 : index
      %28 = vector.load %arg8[%c0_14, %c0_15] : memref<4x1xf32, #tpu.memory_space<vmem>>, vector<4x1xf32>
      %29 = vector.broadcast %25 : f32 to vector<4x1xf32>
      %30 = arith.mulf %27, %29 : vector<4x1xf32>
      %31 = arith.addf %28, %30 : vector<4x1xf32>
      %c0_16 = arith.constant 0 : index
      %c0_17 = arith.constant 0 : index
      %32 = vector.load %arg8[%c0_16, %c0_17] : memref<4x1xf32, #tpu.memory_space<vmem>>, vector<4x1xf32>
      tpu.vector_store %arg8[%c0_16, %c0_17], %31 {strides = array<i32>} : memref<4x1xf32, #tpu.memory_space<vmem>>, vector<4x1xf32>,
      %c0_18 = arith.constant 0 : index
      %c0_19 = arith.constant 0 : index
      %33 = vector.load %arg9[%c0_18, %c0_19] : memref<4x1xf32, #tpu.memory_space<vmem>>, vector<4x1xf32>
      %34 = arith.addf %33, %12 : vector<4x1xf32>
      %35 = arith.mulf %27, %27 : vector<4x1xf32>
      %36 = arith.mulf %23, %25 : f32
      %37 = vector.broadcast %36 : f32 to vector<4x1xf32>
      %38 = arith.mulf %35, %37 : vector<4x1xf32>
      %39 = arith.addf %34, %38 : vector<4x1xf32>
      %c0_20 = arith.constant 0 : index
      %c0_21 = arith.constant 0 : index
      %40 = vector.load %arg9[%c0_20, %c0_21] : memref<4x1xf32, #tpu.memory_space<vmem>>, vector<4x1xf32>
      tpu.vector_store %arg9[%c0_20, %c0_21], %39 {strides = array<i32>} : memref<4x1xf32, #tpu.memory_space<vmem>>, vector<4x1xf32>,
    } else {
    }
    %c1_i32_7 = arith.constant 1 : i32
    %19 = arith.cmpi eq, %1, %c1_i32_7 : i32
    %20 = arith.extui %19 : i1 to i32
    %c0_i32_8 = arith.constant 0 : i32
    %21 = arith.cmpi ne, %20, %c0_i32_8 : i32
    scf.if %21 {
      %c0_9 = arith.constant 0 : index
      %c0_10 = arith.constant 0 : index
      %22 = vector.load %arg9[%c0_9, %c0_10] : memref<4x1xf32, #tpu.memory_space<vmem>>, vector<4x1xf32>
      %cst_11 = arith.constant 0.001953125 : f32
      %23 = vector.broadcast %cst_11 : f32 to vector<4x1xf32>
      %24 = arith.mulf %22, %23 : vector<4x1xf32>
      %cst_12 = arith.constant 1.000000e-03 : f32
      %25 = vector.broadcast %cst_12 : f32 to vector<4x1xf32>
      %26 = arith.addf %24, %25 : vector<4x1xf32>
      %27 = math.rsqrt %26 : vector<4x1xf32>
      %c0_13 = arith.constant 0 : index
      %c0_14 = arith.constant 0 : index
      %28 = vector.load %arg4[%c0_13, %c0_14] : memref<4x1xf32, #tpu.memory_space<vmem>>, vector<4x1xf32>
      %29 = arith.mulf %28, %27 : vector<4x1xf32>
      %c0_15 = arith.constant 0 : index
      %c0_16 = arith.constant 0 : index
      %30 = vector.load %arg6[%c0_15, %c0_16] : memref<4x1xf32, #tpu.memory_space<vmem>>, vector<4x1xf32>
      tpu.vector_store %arg6[%c0_15, %c0_16], %29 {strides = array<i32>} : memref<4x1xf32, #tpu.memory_space<vmem>>, vector<4x1xf32>,
      %c0_17 = arith.constant 0 : index
      %c0_18 = arith.constant 0 : index
      %31 = vector.load %arg5[%c0_17, %c0_18] : memref<4x1xf32, #tpu.memory_space<vmem>>, vector<4x1xf32>
      %c0_19 = arith.constant 0 : index
      %c0_20 = arith.constant 0 : index
      %32 = vector.load %arg8[%c0_19, %c0_20] : memref<4x1xf32, #tpu.memory_space<vmem>>, vector<4x1xf32>
      %33 = arith.mulf %32, %29 : vector<4x1xf32>
      %34 = arith.subf %31, %33 : vector<4x1xf32>
      %c0_21 = arith.constant 0 : index
      %c0_22 = arith.constant 0 : index
      %35 = vector.load %arg7[%c0_21, %c0_22] : memref<4x1xf32, #tpu.memory_space<vmem>>, vector<4x1xf32>
      tpu.vector_store %arg7[%c0_21, %c0_22], %34 {strides = array<i32>} : memref<4x1xf32, #tpu.memory_space<vmem>>, vector<4x1xf32>,
    } else {
    }
    return
  }
  func.func @transform_0(%arg0: i32, %arg1: i32, %arg2: i32) -> (i32, i32, i32) {
    %c0_i32 = arith.constant 0 : i32
    return %arg1, %arg0, %arg2 : i32, i32, i32
  }
  func.func @transform_1(%arg0: i32, %arg1: i32, %arg2: i32) -> (i32, i32) {
    %c0_i32 = arith.constant 0 : i32
    %c0_i32_0 = arith.constant 0 : i32
    return %arg0, %c0_i32 : i32, i32
  }
  func.func @transform_2(%arg0: i32, %arg1: i32, %arg2: i32) -> (i32, i32) {
    %c0_i32 = arith.constant 0 : i32
    %c0_i32_0 = arith.constant 0 : i32
    return %arg0, %c0_i32 : i32, i32
  }
  func.func @transform_3(%arg0: i32, %arg1: i32, %arg2: i32) -> (i32, i32) {
    %c0_i32 = arith.constant 0 : i32
    %c0_i32_0 = arith.constant 0 : i32
    return %arg0, %c0_i32 : i32, i32
  }
  func.func @transform_4(%arg0: i32, %arg1: i32, %arg2: i32) -> (i32, i32) {
    %c0_i32 = arith.constant 0 : i32
    %c0_i32_0 = arith.constant 0 : i32
    return %arg0, %c0_i32 : i32, i32
  }
}

</mosaic_0001>

<llo_original>
// kernel: tpu_custom_call.1
$region0: #{tpu_custom_call.1}
  #allocation0 [shape = 'u32[]', space=smem, size = 0x4, offset = 0x4, fixed_abs, tag = 'smem constant byte address 0x4 - core index']
  #allocation1 [shape = 'u32[72,128]{1,0:T(1,128)}', space=vmem, size = 0x9000, scoped, tag = 'internal scratch']
  #allocation2 [shape = 'f32[4,1]{1,0:T(4,128)}', space=vmem, size = 0x800, scoped, tag = 'scratch operand']
  #allocation3 [shape = 'f32[4,1]{1,0:T(4,128)}', space=vmem, size = 0x800, scoped, tag = 'scratch operand']
  %s0 = inlined_call_operand.hbm [shape: f32[2,4,256], index: 0, kind: input, shape index: {}]
  %s1 = inlined_call_operand.vmem [shape: f32[4,1], index: 1, kind: input, shape index: {}]
  %s2 = inlined_call_operand.vmem [shape: f32[4,1], index: 2, kind: input, shape index: {}]
  %s3 = inlined_call_operand.vmem [shape: f32[4,1], index: 3, kind: output, shape index: {0}]
  %s4 = inlined_call_operand.vmem [shape: f32[4,1], index: 4, kind: output, shape index: {1}]
  %5 = xla_tuple %s3, %s4
  %s6 = sld [smem:[#allocation0]]
  $region69: #{tpu_custom_call.1} parent=0
    _
  %s8 = ssub.s32 1, %s6
  %s9 = scalar_select 0, %s8, %s6
  $region1: #{tpu_custom_call.1} parent=0
    #allocation4 [shape = 'u8[8192]{0}', space=vmem, size = 0x2000, scoped, tag = 'input window, operand 0']
    #allocation5 [shape = 's32[2]{0}', space=sflag, size = 0x8, scoped, tag = 'scoped memory for tpu_custom_call.1']
    %10 = vsyncpa [#allocation5], 0
    %s11 = scalar_lea.sflag [#allocation5], 1
    %12 = vsyncpa %s11, 0
    loop: start=0, step=1, limit=4
    $region2: #{tpu_custom_call.1} parent=1 // loop_pre_header
      _
    $region3: #{tpu_custom_call.1} parent=1 // loop_header
      %s14 = sphi 0, %s18
      %p15 = scmp.ge.s32.totalorder %s14, 4
      %s21 = sphi 0, %s40
      %s22 = sphi 0, %s36
      %s23 = sphi 0, %s32
      %s24 = sphi 0, %s21
      %s25 = sphi 0, %s22
      %s26 = sphi 0, %s23
      %s27 = sphi 0, %s24
      %s28 = sphi 0, %s25
      %s29 = sphi 0, %s26
      %s47 = sphi 0, %s49
      %s50 = sphi 0, %s47
      %s51 = sphi 0, %s50
      %s67 = sphi 0, %s51
      %s73 = sphi 0, %s75
      %s76 = sphi 0, %s73
      %s77 = sphi 0, %s76
      %s93 = sphi 0, %s77
      %s99 = sphi 0, %s101
      %s102 = sphi 0, %s99
      %s103 = sphi 0, %s102
      %s119 = sphi 0, %s103
      %s125 = sphi 0, %s127
      %s128 = sphi 0, %s125
      %s129 = sphi 0, %s128
      %s145 = sphi 0, %s129
      %s151 = sphi 0, %s153
      %s154 = sphi 0, %s151
      %s155 = sphi 0, %s154
      %s171 = sphi 0, %s155
    $region4: #{tpu_custom_call.1} parent=1 // loop_header_branch
      %17 = sbr.rel (%p15) target = $region8
    $region5: #{tpu_custom_call.1} parent=1 // loop_body
      %s19 = ssub.s32 %s14, 1
      %s20 = ssub.s32 %s14, 2
      %s30 = sadd.s32 1, %s23
      %p31 = scmp.ge.s32.totalorder %s30, 1
      %s32 = scalar_select %p31, 0, %s30
      %s33 = sadd.s32 1, %s22
      %s34 = scalar_select %p31, %s33, %s22
      %p35 = scmp.ge.s32.totalorder %s34, 2
      %s36 = scalar_select %p35, 0, %s34
      %s37 = sadd.s32 1, %s21
      %s38 = scalar_select %p35, %s37, %s21
      %p39 = scmp.ge.s32.totalorder %s38, 1
      %s40 = scalar_select %p39, 0, %s38
      %s41 = ssub.s32 %s22, %s36
      %s42 = ssub.s32 %s21, %s40
      %s43 = sor.u32 %s41, %s42
      %s44 = ssub.s32 %s23, %s32
      %s45 = sor.u32 %s43, %s44
      %p46 = scmp.eq.s32.totalorder %s45, 0
      %s48 = sadd.s32 %s47, 1
      %s49 = scalar_select %p46, %s47, %s48
      %p52 = pneg %p46
      %p53 = scmp.eq.s32.totalorder %s14, 1
      %p54 = por %p52, %p53
      %p55 = scmp.ne.s32.totalorder %s47, %s50
      %p56 = scmp.eq.s32.totalorder %s14, 0
      %p57 = por %p55, %p56
      %p58 = scmp.ne.s32.totalorder %s47, %s50
      %p59 = scmp.eq.s32.totalorder %s19, 1
      %p60 = por %p58, %p59
      %p61 = scmp.ne.s32.totalorder %s50, %s51
      %p62 = scmp.eq.s32.totalorder %s19, 0
      %p63 = por %p61, %p62
      %p64 = scmp.ne.s32.totalorder %s50, %s51
      %p65 = scmp.eq.s32.totalorder %s20, 1
      %p66 = por %p64, %p65
      %p68 = scmp.ne.s32.totalorder %s51, %s67
      %p69 = scmp.eq.s32.totalorder %s20, 0
      %p70 = por %p68, %p69
      %s71 = ssub.s32 %s21, %s40
      %p72 = scmp.eq.s32.totalorder %s71, 0
      %s74 = sadd.s32 %s73, 1
      %s75 = scalar_select %p72, %s73, %s74
      %p78 = pneg %p72
      %p79 = scmp.eq.s32.totalorder %s14, 1
      %p80 = por %p78, %p79
      %p81 = scmp.ne.s32.totalorder %s73, %s76
      %p82 = scmp.eq.s32.totalorder %s14, 0
      %p83 = por %p81, %p82
      %p84 = scmp.ne.s32.totalorder %s73, %s76
      %p85 = scmp.eq.s32.totalorder %s19, 1
      %p86 = por %p84, %p85
      %p87 = scmp.ne.s32.totalorder %s76, %s77
      %p88 = scmp.eq.s32.totalorder %s19, 0
      %p89 = por %p87, %p88
      %p90 = scmp.ne.s32.totalorder %s76, %s77
      %p91 = scmp.eq.s32.totalorder %s20, 1
      %p92 = por %p90, %p91
      %p94 = scmp.ne.s32.totalorder %s77, %s93
      %p95 = scmp.eq.s32.totalorder %s20, 0
      %p96 = por %p94, %p95
      %s97 = ssub.s32 %s21, %s40
      %p98 = scmp.eq.s32.totalorder %s97, 0
      %s100 = sadd.s32 %s99, 1
      %s101 = scalar_select %p98, %s99, %s100
      %p104 = pneg %p98
      %p105 = scmp.eq.s32.totalorder %s14, 1
      %p106 = por %p104, %p105
      %p107 = scmp.ne.s32.totalorder %s99, %s102
      %p108 = scmp.eq.s32.totalorder %s14, 0
      %p109 = por %p107, %p108
      %p110 = scmp.ne.s32.totalorder %s99, %s102
      %p111 = scmp.eq.s32.totalorder %s19, 1
      %p112 = por %p110, %p111
      %p113 = scmp.ne.s32.totalorder %s102, %s103
      %p114 = scmp.eq.s32.totalorder %s19, 0
      %p115 = por %p113, %p114
      %p116 = scmp.ne.s32.totalorder %s102, %s103
      %p117 = scmp.eq.s32.totalorder %s20, 1
      %p118 = por %p116, %p117
      %p120 = scmp.ne.s32.totalorder %s103, %s119
      %p121 = scmp.eq.s32.totalorder %s20, 0
      %p122 = por %p120, %p121
      %s123 = ssub.s32 %s21, %s40
      %p124 = scmp.eq.s32.totalorder %s123, 0
      %s126 = sadd.s32 %s125, 1
      %s127 = scalar_select %p124, %s125, %s126
      %p130 = pneg %p124
      %p131 = scmp.eq.s32.totalorder %s14, 1
      %p132 = por %p130, %p131
      %p133 = scmp.ne.s32.totalorder %s125, %s128
      %p134 = scmp.eq.s32.totalorder %s14, 0
      %p135 = por %p133, %p134
      %p136 = scmp.ne.s32.totalorder %s125, %s128
      %p137 = scmp.eq.s32.totalorder %s19, 1
      %p138 = por %p136, %p137
      %p139 = scmp.ne.s32.totalorder %s128, %s129
      %p140 = scmp.eq.s32.totalorder %s19, 0
      %p141 = por %p139, %p140
      %p142 = scmp.ne.s32.totalorder %s128, %s129
      %p143 = scmp.eq.s32.totalorder %s20, 1
      %p144 = por %p142, %p143
      %p146 = scmp.ne.s32.totalorder %s129, %s145
      %p147 = scmp.eq.s32.totalorder %s20, 0
      %p148 = por %p146, %p147
      %s149 = ssub.s32 %s21, %s40
      %p150 = scmp.eq.s32.totalorder %s149, 0
      %s152 = sadd.s32 %s151, 1
      %s153 = scalar_select %p150, %s151, %s152
      %p156 = pneg %p150
      %p157 = scmp.eq.s32.totalorder %s14, 1
      %p158 = por %p156, %p157
      %p159 = scmp.ne.s32.totalorder %s151, %s154
      %p160 = scmp.eq.s32.totalorder %s14, 0
      %p161 = por %p159, %p160
      %p162 = scmp.ne.s32.totalorder %s151, %s154
      %p163 = scmp.eq.s32.totalorder %s19, 1
      %p164 = por %p162, %p163
      %p165 = scmp.ne.s32.totalorder %s154, %s155
      %p166 = scmp.eq.s32.totalorder %s19, 0
      %p167 = por %p165, %p166
      %p168 = scmp.ne.s32.totalorder %s154, %s155
      %p169 = scmp.eq.s32.totalorder %s20, 1
      %p170 = por %p168, %p169
      %p172 = scmp.ne.s32.totalorder %s155, %s171
      %p173 = scmp.eq.s32.totalorder %s20, 0
      %p174 = por %p172, %p173
      %p175 = scmp.le.s32.totalorder 1, %s14
      %p176 = scmp.lt.s32.totalorder %s14, 3
      %p177 = pnand %p175, %p176
      %p178 = pneg %p177
      // Predicated region
      $region9: #{tpu_custom_call.1} parent=5 // pred_check
        _
      $region10: #{tpu_custom_call.1} parent=5 // pred_check_branch
        %180 = sbr.rel (%p177) target = $region12
      $region11: #{tpu_custom_call.1} parent=5 // pred_region
        %s181 = ssub.s32 %s14, 1
        // Predicated region
        $region13: #{tpu_custom_call.1} parent=11 // pred_check
          %p182 = pneg %p89
        $region14: #{tpu_custom_call.1} parent=11 // pred_check_branch
          %184 = sbr.rel (%p182) target = $region16
        $region15: #{tpu_custom_call.1} parent=11 // pred_region
          %p185 = scmp.lt.s32.totalorder %s24, 0
          %s186 = scalar_select %p185, %s24, 0
          %s187 = smul.addr %s186, 4
          %s188 = scalar_lea.vmem %s1, %s187
        $region16: #{tpu_custom_call.1} parent=11 // pred_fallthru
          _
        // Predicated region
        $region17: #{tpu_custom_call.1} parent=11 // pred_check
          %p189 = pneg %p115
        $region18: #{tpu_custom_call.1} parent=11 // pred_check_branch
          %191 = sbr.rel (%p189) target = $region20
        $region19: #{tpu_custom_call.1} parent=11 // pred_region
          %p192 = scmp.lt.s32.totalorder %s24, 0
          %s193 = scalar_select %p192, %s24, 0
          %s194 = smul.addr %s193, 4
          %s195 = scalar_lea.vmem %s2, %s194
        $region20: #{tpu_custom_call.1} parent=11 // pred_fallthru
          _
      $region12: #{tpu_custom_call.1} parent=5 // pred_fallthru
        _
      %p196 = scmp.lt.s32.totalorder %s14, 2
      // Predicated region
      $region21: #{tpu_custom_call.1} parent=5 // pred_check
        %p197 = pneg %p196
      $region22: #{tpu_custom_call.1} parent=5 // pred_check_branch
        %199 = sbr.rel (%p197) target = $region24
      $region23: #{tpu_custom_call.1} parent=5 // pred_region
        // Predicated region
        $region25: #{tpu_custom_call.1} parent=23 // pred_check
          %p200 = pneg %p57
        $region26: #{tpu_custom_call.1} parent=23 // pred_check_branch
          %202 = sbr.rel (%p200) target = $region28
        $region27: #{tpu_custom_call.1} parent=23 // pred_region
          %s203 = sand.u32 %s47, 1
          %s204 = scalar_lea.sflag [#allocation5], %s203
          %s205 = sand.u32 %s47, 1
          %s206 = smul.addr %s205, 8
          %s207 = scalar_lea.vmem [#allocation4], %s206
          %s208 = smul.u32 2, %s23
          %210 = vsyncadd %s204, 0
          %s211 = smul.addr %s21, 2
          %s212 = sadd.s32 %s208, %s211
          %s213 = smul.addr %s22, 2
          %s214 = sadd.s32 %s212, %s213
          %s215 = smul.addr %s214, 4
          %s216 = scalar_lea.hbm %s0, %s215
          %s218 = sshll.u32 %s216, 4
          %s219 = int_to_ptr.hbm [resolvable:$true] %s218
          %s220 = sshll.u32 %s207, 4
          %s221 = int_to_ptr.vmem [resolvable:$true] %s220
          %223 = dma.hbm_to_vmem [thread:$0]  %s219, 128, %s221, %s204
        $region28: #{tpu_custom_call.1} parent=23 // pred_fallthru
          _
      $region24: #{tpu_custom_call.1} parent=5 // pred_fallthru
        _
      %p224 = scmp.le.s32.totalorder 1, %s14
      %p225 = scmp.lt.s32.totalorder %s14, 3
      %p226 = pnand %p224, %p225
      %p227 = pneg %p226
      // Predicated region
      $region29: #{tpu_custom_call.1} parent=5 // pred_check
        _
      $region30: #{tpu_custom_call.1} parent=5 // pred_check_branch
        %229 = sbr.rel (%p226) target = $region32
      $region31: #{tpu_custom_call.1} parent=5 // pred_region
        %s230 = ssub.s32 %s14, 1
        %s231 = sand.u32 %s50, 1
        %s232 = scalar_lea.sflag [#allocation5], %s231
        %s233 = sand.u32 %s50, 1
        %s234 = smul.addr %s233, 8
        %s235 = scalar_lea.vmem [#allocation4], %s234
        // Predicated region
        $region33: #{tpu_custom_call.1} parent=31 // pred_check
          %p236 = pneg %p63
        $region34: #{tpu_custom_call.1} parent=31 // pred_check_branch
          %238 = sbr.rel (%p236) target = $region36
        $region35: #{tpu_custom_call.1} parent=31 // pred_region
          %240 = dma.done %s232, 128
        $region36: #{tpu_custom_call.1} parent=31 // pred_fallthru
          _
        %s241 = sand.u32 %s50, 1
        %s242 = scalar_lea.sflag [#allocation5], %s241
        %s243 = sand.u32 %s50, 1
        %s244 = smul.addr %s243, 8
        %s245 = scalar_lea.vmem [#allocation4], %s244
        %p246 = pneg %p63
        %p247 = pneg %p60
        %p248 = scmp.lt.s32.totalorder %s24, 0
        %s249 = scalar_select %p248, %s24, 0
        %s250 = smul.addr %s249, 4
        %s251 = scalar_lea.vmem %s1, %s250
        %p252 = pneg %p89
        %p253 = pneg %p86
        %p254 = scmp.lt.s32.totalorder %s24, 0
        %s255 = scalar_select %p254, %s24, 0
        %s256 = smul.addr %s255, 4
        %s257 = scalar_lea.vmem %s2, %s256
        %p258 = pneg %p115
        %p259 = pneg %p112
        %p260 = pneg %p141
        %p261 = pneg %p138
        %p262 = scmp.lt.s32.totalorder %s24, 0
        %s263 = scalar_select %p262, %s24, 0
        %s264 = smul.addr %s263, 4
        %s265 = scalar_lea.vmem %s3, %s264
        %p266 = pneg %p167
        %p267 = pneg %p164
        %p268 = scmp.lt.s32.totalorder %s24, 0
        %s269 = scalar_select %p268, %s24, 0
        %s270 = smul.addr %s269, 4
        %s271 = scalar_lea.vmem %s4, %s270
        %s272 = smul.u32 2, %s26
        %p273 = scmp.lt.s32.totalorder %s24, 0
        %s274 = scalar_select %p273, %s24, 0
        %s275 = smul.addr %s274, 4
        %s276 = scalar_lea.vmem %s1, %s275
        %p277 = scmp.lt.s32.totalorder %s24, 0
        %s278 = scalar_select %p277, %s24, 0
        %s279 = smul.addr %s278, 4
        %s280 = scalar_lea.vmem %s2, %s279
        %p281 = scmp.lt.s32.totalorder %s24, 0
        %s282 = scalar_select %p281, %s24, 0
        %s283 = smul.addr %s282, 4
        %s284 = scalar_lea.vmem %s3, %s283
        %p285 = scmp.lt.s32.totalorder %s24, 0
        %s286 = scalar_select %p285, %s24, 0
        %s287 = smul.addr %s286, 4
        %s288 = scalar_lea.vmem %s4, %s287
        %s289 = sadd.s32 %s25, %s26
        %v290 = vld [vmem:[%s235] sm:$0xff]
        %292 = vst [vmem:[#allocation1] ss:$2 sm:$0xff] %v290
        %v293 = vld.sshfl [vmem:[#allocation1] sm:$0xff pattern:$0x75316420]
        %v294 = vld.sshfl [vmem:[#allocation1 + $0x8] sm:$0xff pattern:$0x75316420]
        %vm297 = vcmask 1043456
        %v298 = vsel %vm297, %v293, 0.0
        %v299 = vsel %vm297, %v294, 0.0
        %v300 = vadd.f32 %v298, %v299
        %301 = vadd.xlane.f32.xlu0 %v300
        %v302 = vpop.xlane.xlu0 %301
        %v303 = vmul.f32 %v302, 0.00390625
        %v306 = vunpack.c.l.s4 839922192
        %v307 = vunpack.c.0.s8 %v306
        %v308 = vperm.slane %v303, %v307
        %v310 = vsub.f32 %v290, %v308
        %v311 = vmul.f32 %v310, %v310
        %313 = vst [vmem:[#allocation1] ss:$2 sm:$0xff] %v311
        %v314 = vld.sshfl [vmem:[#allocation1] sm:$0xff pattern:$0x75316420]
        %v315 = vld.sshfl [vmem:[#allocation1 + $0x8] sm:$0xff pattern:$0x75316420]
        %v318 = vsel %vm297, %v314, 0.0
        %v319 = vsel %vm297, %v315, 0.0
        %v320 = vadd.f32 %v318, %v319
        %321 = vadd.xlane.f32.xlu0 %v320
        %v322 = vpop.xlane.xlu0 %321
        %p323 = scmp.eq.s32.totalorder %s289, 0
        // Predicated region
        $region37: #{tpu_custom_call.1} parent=31 // pred_check
          %p324 = pneg %p323
        $region38: #{tpu_custom_call.1} parent=31 // pred_check_branch
          %326 = sbr.rel (%p324) target = $region40
        $region39: #{tpu_custom_call.1} parent=31 // pred_region
          %vm327 = vcmask 3072
          %328 = vst.msk [vmem:[#allocation2] sm:$0xf] %vm327, %v303
          %329 = vst.msk [vmem:[#allocation3] sm:$0xf] %vm327, %v322
        $region40: #{tpu_custom_call.1} parent=31 // pred_fallthru
          _
        %p330 = scmp.gt.s32.totalorder %s289, 0
        // Predicated region
        $region41: #{tpu_custom_call.1} parent=31 // pred_check
          %p331 = pneg %p330
        $region42: #{tpu_custom_call.1} parent=31 // pred_check_branch
          %333 = sbr.rel (%p331) target = $region44
        $region43: #{tpu_custom_call.1} parent=31 // pred_region
          %s334 = scvt.s32.f32 %s289
          %s335 = smul.f32 %s334, 256.0
          %s336 = sadd.f32 %s335, 256.0
          %v337 = vstv %s336
          %v338 = vrcp.pop %v337
          %v339 = vmul.f32 %v337, %v338
          %v340 = vsub.f32 1.0, %v339
          %v341 = vmul.f32 %v338, %v340
          %v342 = vadd.f32 %v338, %v341
          %vm343 = vweird.f32 %v337
          %vm344 = vweird.f32 %v338
          %vm345 = vmor %vm343, %vm344
          %v346 = vsel %vm345, %v338, %v342
          %v347 = vand.u32 2147483647, %v337
          %vm348 = vcmp.eq.f32.partialorder %v347, 8.507059e+37
          %v349 = vand.u32 %v337, 2147483648
          %v350 = vor.u32 1.1754944e-38, %v349
          %v351 = vsel %vm348, %v350, %v346
          %s352 = vtos %v351
          %s353 = smul.f32 256.0, %s352
          %v354 = vld [vmem:[#allocation2] sm:$0xf]
          %v355 = vsub.f32 %v303, %v354
          %v356 = vstv %s353
          %v357 = vmul.f32 %v355, %v356
          %v358 = vadd.f32 %v354, %v357
          %vm359 = vcmask 3072
          %360 = vst.msk [vmem:[#allocation2] sm:$0xf] %vm359, %v358
          %v361 = vld [vmem:[#allocation3] sm:$0xf]
          %v362 = vadd.f32 %v361, %v322
          %v363 = vmul.f32 %v355, %v355
          %s364 = smul.f32 %s335, %s353
          %v365 = vstv %s364
          %v366 = vmul.f32 %v363, %v365
          %v367 = vadd.f32 %v362, %v366
          %368 = vst.msk [vmem:[#allocation3] sm:$0xf] %vm359, %v367
        $region44: #{tpu_custom_call.1} parent=31 // pred_fallthru
          _
        %p369 = scmp.eq.s32.totalorder %s289, 1
        // Predicated region
        $region45: #{tpu_custom_call.1} parent=31 // pred_check
          %p370 = pneg %p369
        $region46: #{tpu_custom_call.1} parent=31 // pred_check_branch
          %372 = sbr.rel (%p370) target = $region48
        $region47: #{tpu_custom_call.1} parent=31 // pred_region
          %v373 = vld [vmem:[#allocation3] sm:$0xf]
          %v374 = vmul.f32 %v373, 0.001953125
          %v375 = vadd.f32 %v374, 0.001
          %v376 = vrsqrt.pop %v375
          %v377 = vmul.f32 %v376, %v375
          %v378 = vmul.f32 %v377, %v376
          %v379 = vmul.f32 0.5, %v378
          %v380 = vsub.f32 1.5, %v379
          %v381 = vmul.f32 %v376, %v380
          %vm382 = vweird.f32 %v375
          %vm383 = vweird.f32 %v376
          %vm384 = vmor %vm382, %vm383
          %v385 = vsel %vm384, %v376, %v381
          %v386 = vld [vmem:[%s276] sm:$0xf]
          %v387 = vmul.f32 %v386, %v385
          %vm388 = vcmask 3072
          %389 = vst.msk [vmem:[%s284] sm:$0xf] %vm388, %v387
          %v390 = vld [vmem:[%s280] sm:$0xf]
          %v391 = vld [vmem:[#allocation2] sm:$0xf]
          %v392 = vmul.f32 %v391, %v387
          %v393 = vsub.f32 %v390, %v392
          %394 = vst.msk [vmem:[%s288] sm:$0xf] %vm388, %v393
        $region48: #{tpu_custom_call.1} parent=31 // pred_fallthru
          _
        %p395 = scmp.lt.s32.totalorder %s24, 0
        %s396 = scalar_select %p395, %s24, 0
        %s397 = smul.addr %s396, 4
        %s398 = scalar_lea.vmem %s3, %s397
        %p399 = scmp.lt.s32.totalorder %s24, 0
        %s400 = scalar_select %p399, %s24, 0
        %s401 = smul.addr %s400, 4
        %s402 = scalar_lea.vmem %s4, %s401
        // Predicated region
        $region49: #{tpu_custom_call.1} parent=31 // pred_check
          %p403 = pneg %p138
        $region50: #{tpu_custom_call.1} parent=31 // pred_check_branch
          %405 = sbr.rel (%p403) target = $region52
        $region51: #{tpu_custom_call.1} parent=31 // pred_region
          _
        $region52: #{tpu_custom_call.1} parent=31 // pred_fallthru
          _
        // Predicated region
        $region53: #{tpu_custom_call.1} parent=31 // pred_check
          %p406 = pneg %p164
        $region54: #{tpu_custom_call.1} parent=31 // pred_check_branch
          %408 = sbr.rel (%p406) target = $region56
        $region55: #{tpu_custom_call.1} parent=31 // pred_region
          _
        $region56: #{tpu_custom_call.1} parent=31 // pred_fallthru
          _
        // Predicated region
        $region57: #{tpu_custom_call.1} parent=31 // pred_check
          %p409 = pneg %p138
        $region58: #{tpu_custom_call.1} parent=31 // pred_check_branch
          %411 = sbr.rel (%p409) target = $region60
        $region59: #{tpu_custom_call.1} parent=31 // pred_region
          %p412 = scmp.lt.s32.totalorder %s24, 0
          %s413 = scalar_select %p412, %s24, 0
          %s414 = smul.addr %s413, 4
          %s415 = scalar_lea.vmem %s3, %s414
        $region60: #{tpu_custom_call.1} parent=31 // pred_fallthru
          _
        // Predicated region
        $region61: #{tpu_custom_call.1} parent=31 // pred_check
          %p416 = pneg %p164
        $region62: #{tpu_custom_call.1} parent=31 // pred_check_branch
          %418 = sbr.rel (%p416) target = $region64
        $region63: #{tpu_custom_call.1} parent=31 // pred_region
          %p419 = scmp.lt.s32.totalorder %s24, 0
          %s420 = scalar_select %p419, %s24, 0
          %s421 = smul.addr %s420, 4
          %s422 = scalar_lea.vmem %s4, %s421
        $region64: #{tpu_custom_call.1} parent=31 // pred_fallthru
          _
      $region32: #{tpu_custom_call.1} parent=5 // pred_fallthru
        _
      %p423 = scmp.le.s32.totalorder 2, %s14
      // Predicated region
      $region65: #{tpu_custom_call.1} parent=5 // pred_check
        %p424 = pneg %p423
      $region66: #{tpu_custom_call.1} parent=5 // pred_check_branch
        %426 = sbr.rel (%p424) target = $region68
      $region67: #{tpu_custom_call.1} parent=5 // pred_region
        %s427 = ssub.s32 %s14, 2
      $region68: #{tpu_custom_call.1} parent=5 // pred_fallthru
        _
    $region6: #{tpu_custom_call.1} parent=1 // loop_footer
      %s18 = sadd.s32 1, %s14
    $region7: #{tpu_custom_call.1} parent=1 // loop_footer_branch
      %13 = sbr.rel target = $region3
    $region8: #{tpu_custom_call.1} parent=1 // loop_exit
      _
    %428 = vsyncpa [#allocation5], 1
    %s429 = scalar_lea.sflag [#allocation5], 1
    %430 = vsyncpa %s429, 1

</llo_original>
